<compile_context>
chip_gen: v5e
topology: v5e:2x2
jax: 0.10.0
libtpu: 0.0.40
codegen_flags: <defaults>
</compile_context>

<pallas_src>
import functools

import jax
import jax.numpy as jnp
from jax.experimental import pallas as pl
from jax.experimental.pallas import tpu as pltpu

NEG_BIG = -1e30       # finite "minus infinity": absorbs finite scores, exp() underflows to exact 0
ATT_EPS = 1e-16       # matches the +1e-16 in neighborhood_aware_softmax
LEAKY_SLOPE = 0.2     # nn.LeakyReLU(0.2)
LANE = 128
ROW_TILE = 128        # keeps both v7x TCs busy; raise to 256-512 on v5e/v6e (128 MiB VMEM) for big N
VMEM_LIMIT = 48 * 1024 * 1024   # explicit limit, safe for v7x's 64 MiB physical VMEM


def _round_up(v, m):
    return (v + m - 1) // m * m


# ---------------------------------------------------------------------------------------------
# Kernel A: fused FFN (Linear + ReLU) + all GAT projections, tiled over node rows.
#   h = relu(x @ W1t + b1);  [p | skip | sc] = h @ Wcat   (single bf16 MXU call, 384 lanes)
# ---------------------------------------------------------------------------------------------
def ffn_proj_kernel(x_ref, w1t_ref, b1_ref, wcat_ref, p_ref, skip_ref, sc_ref, *, hf):
    xb = x_ref[...].astype(jnp.bfloat16)
    h = jnp.dot(xb, w1t_ref[...], preferred_element_type=jnp.float32) + b1_ref[...]
    h = jnp.maximum(h, 0.0)                                          # ReLU (FFN_Block)
    y = jnp.dot(h.astype(jnp.bfloat16), wcat_ref[...],
                preferred_element_type=jnp.float32)                  # (tm, 3*hf) one MXU stream
    p_ref[...] = y[:, :hf].astype(jnp.bfloat16)                      # linear_proj (bf16 MXU rhs later)
    skip_ref[...] = y[:, hf:2 * hf]                                  # skip_proj
    sc_ref[...] = y[:, 2 * hf:3 * hf]                                # [ss | st | 0-pad], lane-dense


def ffn_gat_proj(x, w1t_bf, b1, wcat_bf, tm):
    n, d_in = x.shape
    d_h = w1t_bf.shape[1]
    hf = wcat_bf.shape[1] // 3
    kern = functools.partial(ffn_proj_kernel, hf=hf)
    flops = 2 * n * d_in * d_h + 2 * n * d_h * 3 * hf
    bytes_accessed = (4 * n * d_in + 2 * (d_in * d_h + d_h * 3 * hf) + 4 * d_h
                      + n * hf * (2 + 4 + 4))
    return pl.pallas_call(
        kern,
        out_shape=(jax.ShapeDtypeStruct((n, hf), jnp.bfloat16),     # p
                   jax.ShapeDtypeStruct((n, hf), jnp.float32),      # skip
                   jax.ShapeDtypeStruct((n, hf), jnp.float32)),     # scores (padded to hf lanes)
        grid=(n // tm,),
        in_specs=[
            pl.BlockSpec((tm, d_in), lambda i: (i, 0)),             # x rows (pipelined)
            pl.BlockSpec((d_in, d_h), lambda i: (0, 0)),            # W1^T  (resident, bf16)
            pl.BlockSpec((1, d_h), lambda i: (0, 0)),               # b1    (resident, f32)
            pl.BlockSpec((d_h, 3 * hf), lambda i: (0, 0)),          # [Wp^T|Ws^T|Wp^T@Acat] (bf16)
        ],
        out_specs=(pl.BlockSpec((tm, hf), lambda i: (i, 0)),
                   pl.BlockSpec((tm, hf), lambda i: (i, 0)),
                   pl.BlockSpec((tm, hf), lambda i: (i, 0))),
        compiler_params=pltpu.CompilerParams(
            dimension_semantics=("parallel",),
            vmem_limit_bytes=VMEM_LIMIT),
        cost_estimate=pl.CostEstimate(flops=flops, transcendentals=0,
                                      bytes_accessed=bytes_accessed),
    )(x, w1t_bf, b1, wcat_bf)


# ---------------------------------------------------------------------------------------------
# Kernel B: dense neighborhood softmax + per-head aggregation + skip + ELU, tiled over target
# rows ("parallel"). Source scores (H,N) and projected features (N,H*F, bf16) stay resident.
# ---------------------------------------------------------------------------------------------
def gat_attn_kernel(st_ref, ss_t_ref, bias_ref, p_ref, skip_ref, out_ref,
                    *, num_heads, head_dim):
    st = st_ref[...]                                    # (TM, H)  target scores for this row tile
    ss = ss_t_ref[...]                                  # (H, N)   source scores (resident)
    bias = bias_ref[...].astype(jnp.float32)            # (TM, N)  0 on edges, -1e30 otherwise
    for h in range(num_heads):                          # static unroll; per-head store bounds live set
        sc = st[:, h:h + 1] + ss[h:h + 1, :]            # (TM, N) broadcast add
        sc = jnp.maximum(sc, LEAKY_SLOPE * sc)          # LeakyReLU(0.2)  (slope < 1)
        sc = sc + bias                                  # additive mask: no select, no post-exp *mask
        m = jnp.max(sc, axis=-1, keepdims=True)         # finite: every target has a self-loop
        e = jnp.exp(sc - m)                             # exactly 0 for non-edges
        denom = jnp.sum(e, axis=-1, keepdims=True)
        inv = pl.reciprocal(denom + ATT_EPS, approx=True)   # (TM,1) EUP; replaces TMxN divide
        agg = jnp.dot(e.astype(jnp.bfloat16),
                      p_ref[:, h * head_dim:(h + 1) * head_dim],
                      preferred_element_type=jnp.float32)   # (TM, F) neighbor aggregation (MXU)
        out_ref[:, h * head_dim:(h + 1) * head_dim] = agg * inv
    v = out_ref[...] + skip_ref[...]                    # add_skip_connection + concat heads
    out_ref[...] = jnp.where(v > 0, v, jnp.exp(jnp.minimum(v, 0.0)) - 1.0)   # ELU(alpha=1)


def gat_attention(st, ss_t, bias, p, skip, num_heads, head_dim, tm):
    n, hf = skip.shape
    kern = functools.partial(gat_attn_kernel, num_heads=num_heads, head_dim=head_dim)
    flops = 2 * n * n * hf + 6 * n * n * num_heads
    bytes_accessed = 2 * n * n + 2 * n * hf + 8 * n * hf + 8 * n * num_heads
    return pl.pallas_call(
        kern,
        out_shape=jax.ShapeDtypeStruct((n, hf), jnp.float32),
        grid=(n // tm,),
        in_specs=[
            pl.BlockSpec((tm, num_heads), lambda i: (i, 0)),   # st   (row tile, f32)
            pl.BlockSpec((num_heads, n), lambda i: (0, 0)),    # ss^T (resident, f32)
            pl.BlockSpec((tm, n), lambda i: (i, 0)),           # additive adjacency bias (bf16)
            pl.BlockSpec((n, hf), lambda i: (0, 0)),           # projected features (resident, bf16)
            pl.BlockSpec((tm, hf), lambda i: (i, 0)),          # skip (row tile, f32)
        ],
        out_specs=pl.BlockSpec((tm, hf), lambda i: (i, 0)),
        compiler_params=pltpu.CompilerParams(
            dimension_semantics=("parallel",),
            vmem_limit_bytes=VMEM_LIMIT),
        cost_estimate=pl.CostEstimate(flops=flops,
                                      transcendentals=n * n * num_heads + n * num_heads,
                                      bytes_accessed=bytes_accessed),
    )(st, ss_t, bias, p, skip)


# ---------------------------------------------------------------------------------------------
# Wrapper: parameter packing and layout plumbing stay at the XLA level.
# ---------------------------------------------------------------------------------------------
def prepare_gat_layer_params(raw):
    """raw = (W1, b1, Wp, Ws, a_src, a_trg) in PyTorch layouts -> kernel-ready tensors."""
    w1, b1, wp, ws, a_src, a_trg = raw
    num_heads, head_dim = a_src.shape[1], a_src.shape[2]
    d_h, d_in = w1.shape
    hf = num_heads * head_dim
    assert 2 * num_heads <= hf
    d_in_pad = max(_round_up(d_in, LANE), LANE)

    # FFN weight, input dim zero-padded to a lane multiple (K=128 for the first matmul).
    w1t = jnp.zeros((d_in_pad, d_h), jnp.float32).at[:d_in, :].set(w1.T.astype(jnp.float32))
    b1r = b1.reshape(1, -1).astype(jnp.float32)

    wpt = wp.T.astype(jnp.float32)                     # (Dh, H*F)
    if head_dim == d_h:
        # identity-skip branch of GATLayer.skip_concat_bias (out feature == in feature)
        wst = jnp.tile(jnp.eye(d_h, dtype=jnp.float32), (1, num_heads))
    else:
        wst = ws.T.astype(jnp.float32)                 # (Dh, H*F)

    # Pack a_src / a_trg into a block matrix so per-head score reductions become a matmul, then
    # fold it through Wp^T so scores come straight from h (removes the serial p -> sc MXU dep).
    rows = jnp.arange(hf)
    heads = rows // head_dim
    acat = jnp.zeros((hf, 2 * num_heads), dtype=jnp.float32)
    acat = acat.at[rows, heads].set(a_src.reshape(-1).astype(jnp.float32))
    acat = acat.at[rows, num_heads + heads].set(a_trg.reshape(-1).astype(jnp.float32))
    wsc = jnp.zeros((d_h, hf), jnp.float32).at[:, :2 * num_heads].set(wpt @ acat)

    # One fused weight block: single (tm,Dh)x(Dh,3*hf) MXU call yields p | skip | scores.
    wcat = jnp.concatenate([wpt, wst, wsc], axis=1)

    return dict(w1t=w1t.astype(jnp.bfloat16), b1=b1r, wcat=wcat.astype(jnp.bfloat16),
                num_heads=num_heads, head_dim=head_dim)


def basic_attention_layer(x, adj_mask, index, params, row_tile=ROW_TILE):
    """One (FFN_Block, GATBlock, index_select) stage of BasicAttentionBlock (FFN=True).

    adj_mask[t, s] == 1 iff there is an edge s -> t.  Every target node must have at least one
    incoming edge (the graphs carry self-loops); zero-in-degree targets would need the explicit
    post-exp mask that the additive-bias trick removes.
    """
    num_heads, head_dim = params["num_heads"], params["head_dim"]
    n = x.shape[0]
    n_pad = max(_round_up(n, row_tile), row_tile)
    d_in_pad = params["w1t"].shape[0]

    # Zero-pad node rows / feature lanes; turn adjacency into an additive bf16 bias (halves the
    # dominant (tm,N) DMA stream in kernel B and removes the in-kernel selects).
    xp = jnp.zeros((n_pad, d_in_pad), jnp.float32).at[:n, :x.shape[1]].set(x.astype(jnp.float32))
    bias = jnp.full((n_pad, n_pad), NEG_BIG, jnp.float32)
    bias = bias.at[:n, :n].set(jnp.where(adj_mask > 0, 0.0, NEG_BIG))
    bias = bias.astype(jnp.bfloat16)

    p, skip, sc = ffn_gat_proj(xp, params["w1t"], params["b1"], params["wcat"], row_tile)
    ss_t = sc[:, :num_heads].T                    # (H, N) source scores, lane-dense per head
    st = sc[:, num_heads:2 * num_heads]           # (N, H) target scores
    out = gat_attention(st, ss_t, bias, p, skip, num_heads, head_dim, row_tile)
    # torch.index_select(output, dim=0, index=index) -- row gather kept at the XLA level.
    return jnp.take(out[:n], index, axis=0)


def basic_attention_block(x, adj_masks, indices, per_layer_params):
    out = x
    for adj_mask, index, params in zip(adj_masks, indices, per_layer_params):
        out = basic_attention_layer(out, adj_mask, index, params)
    return out


# ---------------------------------------------------------------------------------------------
# Pure-JAX reference: faithful edge-list implementation of the PyTorch forward (for the check).
# ---------------------------------------------------------------------------------------------
def reference_forward(x, edge_indices, indices, raw_params):
    hi = jax.lax.Precision.HIGHEST
    out = x
    for edge_index, index, (w1, b1, wp, ws, a_src, a_trg) in zip(edge_indices, indices, raw_params):
        n = out.shape[0]
        d_h = w1.shape[0]
        num_heads, head_dim = a_src.shape[1], a_src.shape[2]
        # FFN_Block
        h = jnp.maximum(jnp.dot(out, w1.T, precision=hi) + b1, 0.0)
        # GATBlock (dropout=0 -> identity)
        p = jnp.dot(h, wp.T, precision=hi).reshape(n, num_heads, head_dim)
        ss = (p * a_src).sum(-1)                          # (N, H)
        st = (p * a_trg).sum(-1)
        src, trg = edge_index[0], edge_index[1]
        e = ss[src] + st[trg]                             # (E, H)
        e = jnp.where(e >= 0, e, LEAKY_SLOPE * e)
        e = e - jnp.max(e)
        e_exp = jnp.exp(e)
        denom = jax.ops.segment_sum(e_exp, trg, num_segments=n)          # (N, H)
        att = e_exp / (denom[trg] + ATT_EPS)                             # (E, H)
        weighted = p[src] * att[:, :, None]                              # (E, H, F)
        agg = jax.ops.segment_sum(weighted, trg, num_segments=n)         # (N, H, F)
        if head_dim == d_h:
            agg = agg + h[:, None, :]
        else:
            agg = agg + jnp.dot(h, ws.T, precision=hi).reshape(n, num_heads, head_dim)
        agg = agg.reshape(n, num_heads * head_dim)
        agg = jnp.where(agg > 0, agg, jnp.exp(agg) - 1.0)                # ELU
        out = agg[index]
    return out


if __name__ == "__main__":
    key = jax.random.PRNGKey(0)
    k_x, k_adj, k_idx, k_w1, k_b1, k_wp, k_ws, k_as, k_at = jax.random.split(key, 9)

    # BasicAttentionBlock(input_size=64, hidden_size=128, output_size=128, layer_num=1, FFN=True)
    N = 256                       # number of graph nodes
    INPUT = 64
    HIDDEN = 128
    OUTPUT = 128
    NUM_HEADS = 8                 # GATBlock(hidden, output // 8, 8)
    HEAD_DIM = OUTPUT // NUM_HEADS

    x = jax.random.normal(k_x, (N, INPUT), dtype=jnp.float32)

    # Random sparse directed graph with self loops; adj_mask[t, s] = 1 iff edge s -> t.
    adj_mask = (jax.random.uniform(k_adj, (N, N)) < 0.05).astype(jnp.float32)
    adj_mask = adj_mask.at[jnp.arange(N), jnp.arange(N)].set(1.0)
    assert bool(jnp.all(adj_mask.sum(axis=1) > 0))   # additive-bias softmax needs >=1 in-edge/target
    trg_idx, src_idx = jnp.nonzero(adj_mask)
    edge_index = jnp.stack([src_idx, trg_idx]).astype(jnp.int32)     # (2, E) like PyTorch

    # torch.index_select index for the (single) GAT layer.
    index = jax.random.permutation(k_idx, N).astype(jnp.int32)

    # Parameters in PyTorch layouts (nn.Linear weight = (out, in)).
    w1 = jax.random.normal(k_w1, (HIDDEN, INPUT), dtype=jnp.float32) * 0.1
    b1 = jax.random.normal(k_b1, (HIDDEN,), dtype=jnp.float32) * 0.1
    wp = jax.random.normal(k_wp, (NUM_HEADS * HEAD_DIM, HIDDEN), dtype=jnp.float32) * 0.1   # linear_proj
    ws = jax.random.normal(k_ws, (NUM_HEADS * HEAD_DIM, HIDDEN), dtype=jnp.float32) * 0.1   # skip_proj
    a_src = jax.random.normal(k_as, (1, NUM_HEADS, HEAD_DIM), dtype=jnp.float32) * 0.1
    a_trg = jax.random.normal(k_at, (1, NUM_HEADS, HEAD_DIM), dtype=jnp.float32) * 0.1

    raw_params = [(w1, b1, wp, ws, a_src, a_trg)]
    kernel_params = [prepare_gat_layer_params(p) for p in raw_params]

    out = basic_attention_block(x, [adj_mask], [index], kernel_params)
    out = jax.block_until_ready(out)

    ref = reference_forward(x, [edge_index], [index], raw_params)
    assert out.shape == (N, OUTPUT)
    err = float(jnp.max(jnp.abs(out - ref)))
    # bf16 MXU path vs HIGHEST-precision f32 reference -> loosened tolerance (rounding drift only).
    assert jnp.allclose(out, ref, atol=6e-2, rtol=6e-2), f"mismatch vs reference, max abs err={err}"

    print("KERNEL_OK")
</pallas_src>

<mosaic_0001>
module attributes {stable_mosaic.version = 11 : i64} {
  func.func @ffn_proj_kernel(%arg0: i32, %arg1: memref<128x128xf32, #tpu.memory_space<vmem>>, %arg2: memref<128x128xbf16, #tpu.memory_space<vmem>>, %arg3: memref<1x128xf32, #tpu.memory_space<vmem>>, %arg4: memref<128x384xbf16, #tpu.memory_space<vmem>>, %arg5: memref<128x128xbf16, #tpu.memory_space<vmem>>, %arg6: memref<128x128xf32, #tpu.memory_space<vmem>>, %arg7: memref<128x128xf32, #tpu.memory_space<vmem>>) attributes {dimension_semantics = [#tpu.dimension_semantics<parallel>], iteration_bounds = array<i64: 2>, scalar_prefetch = 0 : i64, scratch_operands = 0 : i64, tpu.core_type = #tpu.core_type<tc>, window_params = [{transform_indices = @transform_0, window_bounds = array<i64: 128, 128>}, {pipeline_mode = #tpu.pipeline_mode<synchronous>, transform_indices = @transform_1, window_bounds = array<i64: 128, 128>}, {pipeline_mode = #tpu.pipeline_mode<synchronous>, transform_indices = @transform_2, window_bounds = array<i64: 1, 128>}, {pipeline_mode = #tpu.pipeline_mode<synchronous>, transform_indices = @transform_3, window_bounds = array<i64: 128, 384>}, {transform_indices = @transform_4, window_bounds = array<i64: 128, 128>}, {transform_indices = @transform_5, window_bounds = array<i64: 128, 128>}, {transform_indices = @transform_6, window_bounds = array<i64: 128, 128>}]} {
    %c0 = arith.constant 0 : index
    %c0_0 = arith.constant 0 : index
    %0 = vector.load %arg1[%c0, %c0_0] : memref<128x128xf32, #tpu.memory_space<vmem>>, vector<128x128xf32>
    %1 = arith.truncf %0 : vector<128x128xf32> to vector<128x128xbf16>
    %c0_1 = arith.constant 0 : index
    %c0_2 = arith.constant 0 : index
    %2 = vector.load %arg2[%c0_1, %c0_2] : memref<128x128xbf16, #tpu.memory_space<vmem>>, vector<128x128xbf16>
    %cst = arith.constant dense<0.000000e+00> : vector<128x128xf32>
    %3 = tpu.matmul %1, %2, %cst {dimension_numbers = #tpu.dot_dimension_numbers<[1], [0], [0], [1], [0, 0, 1, 1], [], []>} : vector<128x128xbf16>, vector<128x128xbf16>, vector<128x128xf32> -> vector<128x128xf32>
    %c0_3 = arith.constant 0 : index
    %c0_4 = arith.constant 0 : index
    %4 = vector.load %arg3[%c0_3, %c0_4] : memref<1x128xf32, #tpu.memory_space<vmem>>, vector<1x128xf32>
    %5 = vector.broadcast %4 : vector<1x128xf32> to vector<128x128xf32>
    %6 = arith.addf %3, %5 : vector<128x128xf32>
    %cst_5 = arith.constant 0.000000e+00 : f32
    %7 = vector.broadcast %cst_5 : f32 to vector<128x128xf32>
    %8 = arith.maximumf %6, %7 : vector<128x128xf32>
    %9 = arith.truncf %8 : vector<128x128xf32> to vector<128x128xbf16>
    %c0_6 = arith.constant 0 : index
    %c0_7 = arith.constant 0 : index
    %10 = vector.load %arg4[%c0_6, %c0_7] : memref<128x384xbf16, #tpu.memory_space<vmem>>, vector<128x384xbf16>
    %cst_8 = arith.constant dense<0.000000e+00> : vector<128x384xf32>
    %11 = tpu.matmul %9, %10, %cst_8 {dimension_numbers = #tpu.dot_dimension_numbers<[1], [0], [0], [1], [0, 0, 1, 1], [], []>} : vector<128x128xbf16>, vector<128x384xbf16>, vector<128x384xf32> -> vector<128x384xf32>
    %12 = vector.extract_strided_slice %11 {offsets = [0, 0], sizes = [128, 128], strides = [1, 1]} : vector<128x384xf32> to vector<128x128xf32>
    %13 = arith.truncf %12 : vector<128x128xf32> to vector<128x128xbf16>
    %c0_9 = arith.constant 0 : index
    %c0_10 = arith.constant 0 : index
    %14 = vector.load %arg5[%c0_9, %c0_10] : memref<128x128xbf16, #tpu.memory_space<vmem>>, vector<128x128xbf16>
    tpu.vector_store %arg5[%c0_9, %c0_10], %13 {strides = array<i32>} : memref<128x128xbf16, #tpu.memory_space<vmem>>, vector<128x128xbf16>,
    %15 = vector.extract_strided_slice %11 {offsets = [0, 128], sizes = [128, 128], strides = [1, 1]} : vector<128x384xf32> to vector<128x128xf32>
    %c0_11 = arith.constant 0 : index
    %c0_12 = arith.constant 0 : index
    %16 = vector.load %arg6[%c0_11, %c0_12] : memref<128x128xf32, #tpu.memory_space<vmem>>, vector<128x128xf32>
    tpu.vector_store %arg6[%c0_11, %c0_12], %15 {strides = array<i32>} : memref<128x128xf32, #tpu.memory_space<vmem>>, vector<128x128xf32>,
    %17 = vector.extract_strided_slice %11 {offsets = [0, 256], sizes = [128, 128], strides = [1, 1]} : vector<128x384xf32> to vector<128x128xf32>
    %c0_13 = arith.constant 0 : index
    %c0_14 = arith.constant 0 : index
    %18 = vector.load %arg7[%c0_13, %c0_14] : memref<128x128xf32, #tpu.memory_space<vmem>>, vector<128x128xf32>
    tpu.vector_store %arg7[%c0_13, %c0_14], %17 {strides = array<i32>} : memref<128x128xf32, #tpu.memory_space<vmem>>, vector<128x128xf32>,
    return
  }
  func.func @transform_0(%arg0: i32) -> (i32, i32) {
    %c0_i32 = arith.constant 0 : i32
    %c0_i32_0 = arith.constant 0 : i32
    return %arg0, %c0_i32 : i32, i32
  }
  func.func @transform_1(%arg0: i32) -> (i32, i32) {
    %c0_i32 = arith.constant 0 : i32
    %c0_i32_0 = arith.constant 0 : i32
    %c0_i32_1 = arith.constant 0 : i32
    return %c0_i32, %c0_i32_0 : i32, i32
  }
  func.func @transform_2(%arg0: i32) -> (i32, i32) {
    %c0_i32 = arith.constant 0 : i32
    %c0_i32_0 = arith.constant 0 : i32
    %c0_i32_1 = arith.constant 0 : i32
    return %c0_i32, %c0_i32_0 : i32, i32
  }
  func.func @transform_3(%arg0: i32) -> (i32, i32) {
    %c0_i32 = arith.constant 0 : i32
    %c0_i32_0 = arith.constant 0 : i32
    %c0_i32_1 = arith.constant 0 : i32
    return %c0_i32, %c0_i32_0 : i32, i32
  }
  func.func @transform_4(%arg0: i32) -> (i32, i32) {
    %c0_i32 = arith.constant 0 : i32
    %c0_i32_0 = arith.constant 0 : i32
    return %arg0, %c0_i32 : i32, i32
  }
  func.func @transform_5(%arg0: i32) -> (i32, i32) {
    %c0_i32 = arith.constant 0 : i32
    %c0_i32_0 = arith.constant 0 : i32
    return %arg0, %c0_i32 : i32, i32
  }
  func.func @transform_6(%arg0: i32) -> (i32, i32) {
    %c0_i32 = arith.constant 0 : i32
    %c0_i32_0 = arith.constant 0 : i32
    return %arg0, %c0_i32 : i32, i32
  }
}

</mosaic_0001>

<llo_original>
// kernel: tpu_custom_call.1
$region0: #{tpu_custom_call.1}
  #allocation0 [shape = 'u32[]', space=smem, size = 0x4, offset = 0x4, fixed_abs, tag = 'smem constant byte address 0x4 - core index']
  #allocation1 [shape = 'u32[72,128]{1,0:T(1,128)}', space=vmem, size = 0x9000, scoped, tag = 'internal scratch']
  %s0 = inlined_call_operand.hbm [shape: f32[256,128], index: 0, kind: input, shape index: {}]
  %s1 = inlined_call_operand.hbm [shape: bf16[128,128], index: 1, kind: input, shape index: {}]
  %s2 = inlined_call_operand.vmem [shape: f32[1,128], index: 2, kind: input, shape index: {}]
  %s3 = inlined_call_operand.hbm [shape: bf16[128,384], index: 3, kind: input, shape index: {}]
  %s4 = inlined_call_operand.hbm [shape: bf16[256,128], index: 4, kind: output, shape index: {0}]
  %s5 = inlined_call_operand.hbm [shape: f32[256,128], index: 5, kind: output, shape index: {1}]
  %s6 = inlined_call_operand.hbm [shape: f32[256,128], index: 6, kind: output, shape index: {2}]
  %7 = xla_tuple %s4, %s5, %s6
  %s8 = sld [smem:[#allocation0]]
  $region77: #{tpu_custom_call.1} parent=0
    _
  %s10 = ssub.s32 1, %s8
  %s11 = scalar_select 0, %s10, %s8
  $region1: #{tpu_custom_call.1} parent=0
    #allocation2 [shape = 'u8[131072]{0}', space=vmem, size = 0x20000, scoped, tag = 'input window, operand 0']
    #allocation3 [shape = 's32[2]{0}', space=sflag, size = 0x8, scoped, tag = 'scoped memory for tpu_custom_call.1']
    #allocation4 [shape = 's32[2]{0}', space=sflag, size = 0x8, scoped, tag = 'scoped memory for tpu_custom_call.1']
    #allocation5 [shape = 'u8[32768]{0}', space=vmem, size = 0x8000, scoped, tag = 'input window, operand 1, single buffered']
    #allocation6 [shape = 's32[1]{0}', space=sflag, size = 0x4, scoped, tag = 'scoped memory for tpu_custom_call.1']
    #allocation7 [shape = 'u8[98304]{0}', space=vmem, size = 0x18000, scoped, tag = 'input window, operand 3, single buffered']
    #allocation8 [shape = 'u8[65536]{0}', space=vmem, size = 0x10000, scoped, tag = 'output window, operand 0']
    #allocation9 [shape = 'u8[131072]{0}', space=vmem, size = 0x20000, scoped, tag = 'output window, operand 1']
    #allocation10 [shape = 's32[2]{0}', space=sflag, size = 0x8, scoped, tag = 'scoped memory for tpu_custom_call.1']
    #allocation11 [shape = 'u8[131072]{0}', space=vmem, size = 0x20000, scoped, tag = 'output window, operand 2']
    %12 = vsyncpa [#allocation3], 0
    %s13 = scalar_lea.sflag [#allocation3], 1
    %14 = vsyncpa %s13, 0
    %15 = vsyncpa [#allocation6], 0
    %16 = vsyncpa [#allocation4], 0
    %s17 = scalar_lea.sflag [#allocation4], 1
    %18 = vsyncpa %s17, 0
    %19 = vsyncpa [#allocation10], 0
    %s20 = scalar_lea.sflag [#allocation10], 1
    %21 = vsyncpa %s20, 0
    loop: start=0, step=1, limit=4
    $region2: #{tpu_custom_call.1} parent=1 // loop_pre_header
      _
    $region3: #{tpu_custom_call.1} parent=1 // loop_header
      %s23 = sphi 0, %s27
      %p24 = scmp.ge.s32.totalorder %s23, 4
      %s33 = sphi 0, %s35
      %s36 = sphi 0, %s33
      %s37 = sphi 0, %s36
      %s53 = sphi 0, %s37
      %s57 = sphi 0, %s57
      %s59 = sphi 0, %s57
      %s60 = sphi 0, %s59
      %s74 = sphi 0, %s60
      %s78 = sphi 0, %s78
      %s80 = sphi 0, %s78
      %s81 = sphi 0, %s80
      %s95 = sphi 0, %s81
      %s99 = sphi 0, %s99
      %s101 = sphi 0, %s99
      %s102 = sphi 0, %s101
      %s116 = sphi 0, %s102
      %s122 = sphi 0, %s124
      %s125 = sphi 0, %s122
      %s126 = sphi 0, %s125
      %s142 = sphi 0, %s126
      %s148 = sphi 0, %s150
      %s151 = sphi 0, %s148
      %s152 = sphi 0, %s151
      %s168 = sphi 0, %s152
      %s174 = sphi 0, %s176
      %s177 = sphi 0, %s174
      %s178 = sphi 0, %s177
      %s194 = sphi 0, %s178
    $region4: #{tpu_custom_call.1} parent=1 // loop_header_branch
      %26 = sbr.rel (%p24) target = $region8
    $region5: #{tpu_custom_call.1} parent=1 // loop_body
      %s28 = ssub.s32 %s23, 1
      %s29 = ssub.s32 %s23, 2
      %s30 = sadd.s32 %s23, 1
      %s31 = ssub.s32 %s23, %s30
      %p32 = scmp.eq.s32.totalorder %s31, 0
      %s34 = sadd.s32 %s33, 1
      %s35 = scalar_select %p32, %s33, %s34
      %p38 = pneg %p32
      %p39 = scmp.eq.s32.totalorder %s23, 1
      %p40 = por %p38, %p39
      %p41 = scmp.ne.s32.totalorder %s33, %s36
      %p42 = scmp.eq.s32.totalorder %s23, 0
      %p43 = por %p41, %p42
      %p44 = scmp.ne.s32.totalorder %s33, %s36
      %p45 = scmp.eq.s32.totalorder %s28, 1
      %p46 = por %p44, %p45
      %p47 = scmp.ne.s32.totalorder %s36, %s37
      %p48 = scmp.eq.s32.totalorder %s28, 0
      %p49 = por %p47, %p48
      %p50 = scmp.ne.s32.totalorder %s36, %s37
      %p51 = scmp.eq.s32.totalorder %s29, 1
      %p52 = por %p50, %p51
      %p54 = scmp.ne.s32.totalorder %s37, %s53
      %p55 = scmp.eq.s32.totalorder %s29, 0
      %p56 = por %p54, %p55
      %s58 = sadd.s32 %s57, 1
      %p61 = scmp.eq.s32.totalorder %s23, 1
      %p62 = scmp.ne.s32.totalorder %s57, %s59
      %p63 = scmp.eq.s32.totalorder %s23, 0
      %p64 = por %p62, %p63
      %p65 = scmp.ne.s32.totalorder %s57, %s59
      %p66 = scmp.eq.s32.totalorder %s28, 1
      %p67 = por %p65, %p66
      %p68 = scmp.ne.s32.totalorder %s59, %s60
      %p69 = scmp.eq.s32.totalorder %s28, 0
      %p70 = por %p68, %p69
      %p71 = scmp.ne.s32.totalorder %s59, %s60
      %p72 = scmp.eq.s32.totalorder %s29, 1
      %p73 = por %p71, %p72
      %p75 = scmp.ne.s32.totalorder %s60, %s74
      %p76 = scmp.eq.s32.totalorder %s29, 0
      %p77 = por %p75, %p76
      %s79 = sadd.s32 %s78, 1
      %p82 = scmp.eq.s32.totalorder %s23, 1
      %p83 = scmp.ne.s32.totalorder %s78, %s80
      %p84 = scmp.eq.s32.totalorder %s23, 0
      %p85 = por %p83, %p84
      %p86 = scmp.ne.s32.totalorder %s78, %s80
      %p87 = scmp.eq.s32.totalorder %s28, 1
      %p88 = por %p86, %p87
      %p89 = scmp.ne.s32.totalorder %s80, %s81
      %p90 = scmp.eq.s32.totalorder %s28, 0
      %p91 = por %p89, %p90
      %p92 = scmp.ne.s32.totalorder %s80, %s81
      %p93 = scmp.eq.s32.totalorder %s29, 1
      %p94 = por %p92, %p93
      %p96 = scmp.ne.s32.totalorder %s81, %s95
      %p97 = scmp.eq.s32.totalorder %s29, 0
      %p98 = por %p96, %p97
      %s100 = sadd.s32 %s99, 1
      %p103 = scmp.eq.s32.totalorder %s23, 1
      %p104 = scmp.ne.s32.totalorder %s99, %s101
      %p105 = scmp.eq.s32.totalorder %s23, 0
      %p106 = por %p104, %p105
      %p107 = scmp.ne.s32.totalorder %s99, %s101
      %p108 = scmp.eq.s32.totalorder %s28, 1
      %p109 = por %p107, %p108
      %p110 = scmp.ne.s32.totalorder %s101, %s102
      %p111 = scmp.eq.s32.totalorder %s28, 0
      %p112 = por %p110, %p111
      %p113 = scmp.ne.s32.totalorder %s101, %s102
      %p114 = scmp.eq.s32.totalorder %s29, 1
      %p115 = por %p113, %p114
      %p117 = scmp.ne.s32.totalorder %s102, %s116
      %p118 = scmp.eq.s32.totalorder %s29, 0
      %p119 = por %p117, %p118
      %s120 = ssub.s32 %s23, %s30
      %p121 = scmp.eq.s32.totalorder %s120, 0
      %s123 = sadd.s32 %s122, 1
      %s124 = scalar_select %p121, %s122, %s123
      %p127 = pneg %p121
      %p128 = scmp.eq.s32.totalorder %s23, 1
      %p129 = por %p127, %p128
      %p130 = scmp.ne.s32.totalorder %s122, %s125
      %p131 = scmp.eq.s32.totalorder %s23, 0
      %p132 = por %p130, %p131
      %p133 = scmp.ne.s32.totalorder %s122, %s125
      %p134 = scmp.eq.s32.totalorder %s28, 1
      %p135 = por %p133, %p134
      %p136 = scmp.ne.s32.totalorder %s125, %s126
      %p137 = scmp.eq.s32.totalorder %s28, 0
      %p138 = por %p136, %p137
      %p139 = scmp.ne.s32.totalorder %s125, %s126
      %p140 = scmp.eq.s32.totalorder %s29, 1
      %p141 = por %p139, %p140
      %p143 = scmp.ne.s32.totalorder %s126, %s142
      %p144 = scmp.eq.s32.totalorder %s29, 0
      %p145 = por %p143, %p144
      %s146 = ssub.s32 %s23, %s30
      %p147 = scmp.eq.s32.totalorder %s146, 0
      %s149 = sadd.s32 %s148, 1
      %s150 = scalar_select %p147, %s148, %s149
      %p153 = pneg %p147
      %p154 = scmp.eq.s32.totalorder %s23, 1
      %p155 = por %p153, %p154
      %p156 = scmp.ne.s32.totalorder %s148, %s151
      %p157 = scmp.eq.s32.totalorder %s23, 0
      %p158 = por %p156, %p157
      %p159 = scmp.ne.s32.totalorder %s148, %s151
      %p160 = scmp.eq.s32.totalorder %s28, 1
      %p161 = por %p159, %p160
      %p162 = scmp.ne.s32.totalorder %s151, %s152
      %p163 = scmp.eq.s32.totalorder %s28, 0
      %p164 = por %p162, %p163
      %p165 = scmp.ne.s32.totalorder %s151, %s152
      %p166 = scmp.eq.s32.totalorder %s29, 1
      %p167 = por %p165, %p166
      %p169 = scmp.ne.s32.totalorder %s152, %s168
      %p170 = scmp.eq.s32.totalorder %s29, 0
      %p171 = por %p169, %p170
      %s172 = ssub.s32 %s23, %s30
      %p173 = scmp.eq.s32.totalorder %s172, 0
      %s175 = sadd.s32 %s174, 1
      %s176 = scalar_select %p173, %s174, %s175
      %p179 = pneg %p173
      %p180 = scmp.eq.s32.totalorder %s23, 1
      %p181 = por %p179, %p180
      %p182 = scmp.ne.s32.totalorder %s174, %s177
      %p183 = scmp.eq.s32.totalorder %s23, 0
      %p184 = por %p182, %p183
      %p185 = scmp.ne.s32.totalorder %s174, %s177
      %p186 = scmp.eq.s32.totalorder %s28, 1
      %p187 = por %p185, %p186
      %p188 = scmp.ne.s32.totalorder %s177, %s178
      %p189 = scmp.eq.s32.totalorder %s28, 0
      %p190 = por %p188, %p189
      %p191 = scmp.ne.s32.totalorder %s177, %s178
      %p192 = scmp.eq.s32.totalorder %s29, 1
      %p193 = por %p191, %p192
      %p195 = scmp.ne.s32.totalorder %s178, %s194
      %p196 = scmp.eq.s32.totalorder %s29, 0
      %p197 = por %p195, %p196
      %p198 = scmp.le.s32.totalorder 1, %s23
      %p199 = scmp.lt.s32.totalorder %s23, 3
      %p200 = pnand %p198, %p199
      %p201 = pneg %p200
      // Predicated region
      $region9: #{tpu_custom_call.1} parent=5 // pred_check
        _
      $region10: #{tpu_custom_call.1} parent=5 // pred_check_branch
        %203 = sbr.rel (%p200) target = $region12
      $region11: #{tpu_custom_call.1} parent=5 // pred_region
        %s204 = ssub.s32 %s23, 1
        // Predicated region
        $region13: #{tpu_custom_call.1} parent=11 // pred_check
          %p205 = pneg %p70
        $region14: #{tpu_custom_call.1} parent=11 // pred_check_branch
          %207 = sbr.rel (%p205) target = $region16
        $region15: #{tpu_custom_call.1} parent=11 // pred_region
          %209 = vsyncadd [#allocation6], 0
          %s210 = sshll.u32 %s1, 4
          %s211 = int_to_ptr.hbm [resolvable:$true] %s210
          %s212 = sshll.u32 [#allocation5], 4
          %s213 = int_to_ptr.vmem [resolvable:$true] %s212
          %218 = dma.hbm_to_vmem [thread:$0]  %s211, 1024, %s213, [#allocation6], 64, 64, 4
        $region16: #{tpu_custom_call.1} parent=11 // pred_fallthru
          _
        // Predicated region
        $region17: #{tpu_custom_call.1} parent=11 // pred_check
          %p219 = pneg %p91
        $region18: #{tpu_custom_call.1} parent=11 // pred_check_branch
          %221 = sbr.rel (%p219) target = $region20
        $region19: #{tpu_custom_call.1} parent=11 // pred_region
          _
        $region20: #{tpu_custom_call.1} parent=11 // pred_fallthru
          _
        // Predicated region
        $region21: #{tpu_custom_call.1} parent=11 // pred_check
          %p222 = pneg %p112
        $region22: #{tpu_custom_call.1} parent=11 // pred_check_branch
          %224 = sbr.rel (%p222) target = $region24
        $region23: #{tpu_custom_call.1} parent=11 // pred_region
          %226 = vsyncadd [#allocation6], 0
          %s227 = sshll.u32 %s3, 4
          %s228 = int_to_ptr.hbm [resolvable:$true] %s227
          %s229 = sshll.u32 [#allocation7], 4
          %s230 = int_to_ptr.vmem [resolvable:$true] %s229
          %235 = dma.hbm_to_vmem [thread:$0]  %s228, 3072, %s230, [#allocation6], 192, 192, 12
        $region24: #{tpu_custom_call.1} parent=11 // pred_fallthru
          _
      $region12: #{tpu_custom_call.1} parent=5 // pred_fallthru
        _
      %p236 = scmp.lt.s32.totalorder %s23, 2
      // Predicated region
      $region25: #{tpu_custom_call.1} parent=5 // pred_check
        %p237 = pneg %p236
      $region26: #{tpu_custom_call.1} parent=5 // pred_check_branch
        %239 = sbr.rel (%p237) target = $region28
      $region27: #{tpu_custom_call.1} parent=5 // pred_region
        // Predicated region
        $region29: #{tpu_custom_call.1} parent=27 // pred_check
          %p240 = pneg %p43
        $region30: #{tpu_custom_call.1} parent=27 // pred_check_branch
          %242 = sbr.rel (%p240) target = $region32
        $region31: #{tpu_custom_call.1} parent=27 // pred_region
          %s243 = sand.u32 %s33, 1
          %s244 = scalar_lea.sflag [#allocation3], %s243
          %s245 = sand.u32 %s33, 1
          %s246 = smul.addr %s245, 128
          %s247 = scalar_lea.vmem [#allocation2], %s246
          %s248 = smul.u32 16, %s23
          %250 = vsyncadd %s244, 0
          %s251 = smul.addr %s248, 8
          %s252 = scalar_lea.hbm %s0, %s251
          %s253 = sshll.u32 %s252, 4
          %s254 = int_to_ptr.hbm [resolvable:$true] %s253
          %s255 = sshll.u32 %s247, 4
          %s256 = int_to_ptr.vmem [resolvable:$true] %s255
          %261 = dma.hbm_to_vmem [thread:$0]  %s254, 2048, %s256, %s244, 128, 128, 8
        $region32: #{tpu_custom_call.1} parent=27 // pred_fallthru
          _
      $region28: #{tpu_custom_call.1} parent=5 // pred_fallthru
        _
      %p262 = scmp.le.s32.totalorder 1, %s23
      %p263 = scmp.lt.s32.totalorder %s23, 3
      %p264 = pnand %p262, %p263
      %p265 = pneg %p264
      // Predicated region
      $region33: #{tpu_custom_call.1} parent=5 // pred_check
        _
      $region34: #{tpu_custom_call.1} parent=5 // pred_check_branch
        %267 = sbr.rel (%p264) target = $region36
      $region35: #{tpu_custom_call.1} parent=5 // pred_region
        %s268 = ssub.s32 %s23, 1
        %s269 = sand.u32 %s36, 1
        %s270 = scalar_lea.sflag [#allocation3], %s269
        %s271 = sand.u32 %s36, 1
        %s272 = smul.addr %s271, 128
        %s273 = scalar_lea.vmem [#allocation2], %s272
        // Predicated region
        $region37: #{tpu_custom_call.1} parent=35 // pred_check
          %p274 = pneg %p49
        $region38: #{tpu_custom_call.1} parent=35 // pred_check_branch
          %276 = sbr.rel (%p274) target = $region40
        $region39: #{tpu_custom_call.1} parent=35 // pred_region
          %278 = dma.done %s270, 2048
        $region40: #{tpu_custom_call.1} parent=35 // pred_fallthru
          _
        // Predicated region
        $region41: #{tpu_custom_call.1} parent=35 // pred_check
          %p279 = pneg %p70
        $region42: #{tpu_custom_call.1} parent=35 // pred_check_branch
          %281 = sbr.rel (%p279) target = $region44
        $region43: #{tpu_custom_call.1} parent=35 // pred_region
          %283 = dma.done [#allocation6], 1024
        $region44: #{tpu_custom_call.1} parent=35 // pred_fallthru
          _
        // Predicated region
        $region45: #{tpu_custom_call.1} parent=35 // pred_check
          %p284 = pneg %p112
        $region46: #{tpu_custom_call.1} parent=35 // pred_check_branch
          %286 = sbr.rel (%p284) target = $region48
        $region47: #{tpu_custom_call.1} parent=35 // pred_region
          %288 = dma.done [#allocation6], 3072
        $region48: #{tpu_custom_call.1} parent=35 // pred_fallthru
          _
        %s289 = sand.u32 %s36, 1
        %s290 = scalar_lea.sflag [#allocation3], %s289
        %s291 = sand.u32 %s36, 1
        %s292 = smul.addr %s291, 128
        %s293 = scalar_lea.vmem [#allocation2], %s292
        %p294 = pneg %p49
        %p295 = pneg %p46
        %p296 = pneg %p70
        %p297 = pneg %p67
        %p298 = pneg %p91
        %p299 = pneg %p88
        %p300 = pneg %p112
        %p301 = pneg %p109
        %p302 = pneg %p138
        %p303 = pneg %p135
        %s304 = sand.u32 %s125, 1
        %s305 = scalar_lea.sflag [#allocation4], %s304
        %s306 = sand.u32 %s125, 1
        %s307 = smul.addr %s306, 64
        %s308 = scalar_lea.vmem [#allocation8], %s307
        %p309 = pneg %p164
        %p310 = pneg %p161
        %s311 = sand.u32 %s28, 1
        %s312 = scalar_lea.sflag [#allocation10], %s311
        %s313 = sand.u32 %s151, 1
        %s314 = smul.addr %s313, 128
        %s315 = scalar_lea.vmem [#allocation9], %s314
        %p316 = pneg %p190
        %p317 = pneg %p187
        %s318 = sand.u32 %s28, 1
        %s319 = scalar_lea.sflag [#allocation10], %s318
        %s320 = sand.u32 %s177, 1
        %s321 = smul.addr %s320, 128
        %s322 = scalar_lea.vmem [#allocation11], %s321
        %s323 = smul.u32 16, %s28
        %s324 = smul.u32 16, %s28
        %s325 = smul.u32 16, %s28
        %s326 = smul.u32 16, %s28
        %v327 = vld [vmem:[%s273] sm:$0xff]
        %v328 = vld [vmem:[%s273 + $0x8] sm:$0xff]
        %v329 = vld [vmem:[%s273 + $0x10] sm:$0xff]
        %v330 = vld [vmem:[%s273 + $0x18] sm:$0xff]
        %v331 = vld [vmem:[%s273 + $0x20] sm:$0xff]
        %v332 = vld [vmem:[%s273 + $0x28] sm:$0xff]
        %v333 = vld [vmem:[%s273 + $0x30] sm:$0xff]
        %v334 = vld [vmem:[%s273 + $0x38] sm:$0xff]
        %v335 = vld [vmem:[%s273 + $0x40] sm:$0xff]
        %v336 = vld [vmem:[%s273 + $0x48] sm:$0xff]
        %v337 = vld [vmem:[%s273 + $0x50] sm:$0xff]
        %v338 = vld [vmem:[%s273 + $0x58] sm:$0xff]
        %v339 = vld [vmem:[%s273 + $0x60] sm:$0xff]
        %v340 = vld [vmem:[%s273 + $0x68] sm:$0xff]
        %v341 = vld [vmem:[%s273 + $0x70] sm:$0xff]
        %v342 = vld [vmem:[%s273 + $0x78] sm:$0xff]
        %v343 = vpack.c.bf16 %v328, %v327
        %v344 = vpack.c.bf16 %v330, %v329
        %v345 = vpack.c.bf16 %v332, %v331
        %v346 = vpack.c.bf16 %v334, %v333
        %v347 = vpack.c.bf16 %v336, %v335
        %v348 = vpack.c.bf16 %v338, %v337
        %v349 = vpack.c.bf16 %v340, %v339
        %v350 = vpack.c.bf16 %v342, %v341
        %v351 = vld [vmem:[#allocation5] sm:$0xf]
        %v352 = vld [vmem:[#allocation5 + $0x4] sm:$0xf]
        %v353 = vld [vmem:[#allocation5 + $0x8] sm:$0xf]
        %v354 = vld [vmem:[#allocation5 + $0xc] sm:$0xf]
        %v355 = vld [vmem:[#allocation5 + $0x10] sm:$0xf]
        %v356 = vld [vmem:[#allocation5 + $0x14] sm:$0xf]
        %v357 = vld [vmem:[#allocation5 + $0x18] sm:$0xf]
        %v358 = vld [vmem:[#allocation5 + $0x1c] sm:$0xf]
        %v359 = vld [vmem:[#allocation5 + $0x20] sm:$0xf]
        %v360 = vld [vmem:[#allocation5 + $0x24] sm:$0xf]
        %v361 = vld [vmem:[#allocation5 + $0x28] sm:$0xf]
        %v362 = vld [vmem:[#allocation5 + $0x2c] sm:$0xf]
        %v363 = vld [vmem:[#allocation5 + $0x30] sm:$0xf]
        %v364 = vld [vmem:[#allocation5 + $0x34] sm:$0xf]
        %v365 = vld [vmem:[#allocation5 + $0x38] sm:$0xf]
        %v366 = vld [vmem:[#allocation5 + $0x3c] sm:$0xf]
        %v367 = vld [vmem:[%s2] sm:$0x1]
        %v369 = vperm.slane %v367, 0
        %v387 = vunpack.c.l.b16 %v351
        %v388 = vunpack.c.l.b16 %v352
        %v389 = vunpack.c.l.b16 %v353
        %v390 = vunpack.c.l.b16 %v354
        %v391 = vunpack.c.l.b16 %v355
        %v392 = vunpack.c.l.b16 %v356
        %v393 = vunpack.c.l.b16 %v357
        %v394 = vunpack.c.l.b16 %v358
        %v395 = vunpack.c.l.b16 %v359
        %v396 = vunpack.c.l.b16 %v360
        %v397 = vunpack.c.l.b16 %v361
        %v398 = vunpack.c.l.b16 %v362
        %v399 = vunpack.c.l.b16 %v363
        %v400 = vunpack.c.l.b16 %v364
        %v401 = vunpack.c.l.b16 %v365
        %v402 = vunpack.c.l.b16 %v366
        %v403 = vpack.c.b16 %v388, %v387
        %v404 = vpack.c.b16 %v390, %v389
        %v405 = vpack.c.b16 %v392, %v391
        %v406 = vpack.c.b16 %v394, %v393
        %v407 = vpack.c.b16 %v396, %v395
        %v408 = vpack.c.b16 %v398, %v397
        %v409 = vpack.c.b16 %v400, %v399
        %v410 = vpack.c.b16 %v402, %v401
        %419 = vmatpush.bf16.msra.mxu0 %v410
        %420 = vmatpush.bf16.msra.mxu0 %v409
        %421 = vmatpush.bf16.msra.mxu0 %v408
        %422 = vmatpush.bf16.msra.mxu0 %v407
        %423 = vmatpush.bf16.msra.mxu0 %v406
        %424 = vmatpush.bf16.msra.mxu0 %v405
        %425 = vmatpush.bf16.msra.mxu0 %v404
        %426 = vmatpush.bf16.msra.mxu0 %v403
        %427 = vmatmul.bf16.gmra.mxu0 %v343
        %v428 = vpop.f32.mrf.mxu0
        %v429 = vadd.f32 %v369, %v428
        %v430 = vpop.f32.mrf.mxu0
        %v431 = vadd.f32 %v369, %v430
        %432 = vmatmul.bf16.gmra.mxu0 %v344
        %v433 = vpop.f32.mrf.mxu0
        %v434 = vadd.f32 %v369, %v433
        %v435 = vpop.f32.mrf.mxu0
        %v436 = vadd.f32 %v369, %v435
        %437 = vmatmul.bf16.gmra.mxu0 %v345
        %v438 = vpop.f32.mrf.mxu0
        %v439 = vadd.f32 %v369, %v438
        %v440 = vpop.f32.mrf.mxu0
        %v441 = vadd.f32 %v369, %v440
        %442 = vmatmul.bf16.gmra.mxu0 %v346
        %v443 = vpop.f32.mrf.mxu0
        %v444 = vadd.f32 %v369, %v443
        %v445 = vpop.f32.mrf.mxu0
        %v446 = vadd.f32 %v369, %v445
        %447 = vmatmul.bf16.gmra.mxu0 %v347
        %v448 = vpop.f32.mrf.mxu0
        %v449 = vadd.f32 %v369, %v448
        %v450 = vpop.f32.mrf.mxu0
        %v451 = vadd.f32 %v369, %v450
        %452 = vmatmul.bf16.gmra.mxu0 %v348
        %v453 = vpop.f32.mrf.mxu0
        %v454 = vadd.f32 %v369, %v453
        %v455 = vpop.f32.mrf.mxu0
        %v456 = vadd.f32 %v369, %v455
        %457 = vmatmul.bf16.gmra.mxu0 %v349
        %v458 = vpop.f32.mrf.mxu0
        %v459 = vadd.f32 %v369, %v458
        %v460 = vpop.f32.mrf.mxu0
        %v461 = vadd.f32 %v369, %v460
        %462 = vmatmul.bf16.gmra.mxu0 %v350
        %v463 = vpop.f32.mrf.mxu0
        %v464 = vadd.f32 %v369, %v463
        %v465 = vpop.f32.mrf.mxu0
        %v466 = vadd.f32 %v369, %v465
        %467 = vdwg.mxu0
        %v468 = vmax.f32 %v429, 0.0
        %v469 = vmax.f32 %v431, 0.0
        %v470 = vmax.f32 %v434, 0.0
        %v471 = vmax.f32 %v436, 0.0
        %v472 = vmax.f32 %v439, 0.0
        %v473 = vmax.f32 %v441, 0.0
        %v474 = vmax.f32 %v444, 0.0
        %v475 = vmax.f32 %v446, 0.0
        %v476 = vmax.f32 %v449, 0.0
        %v477 = vmax.f32 %v451, 0.0
        %v478 = vmax.f32 %v454, 0.0
        %v479 = vmax.f32 %v456, 0.0
        %v480 = vmax.f32 %v459, 0.0
        %v481 = vmax.f32 %v461, 0.0
        %v482 = vmax.f32 %v464, 0.0
        %v483 = vmax.f32 %v466, 0.0
        %v484 = vpack.c.bf16 %v469, %v468
        %v485 = vpack.c.bf16 %v471, %v470
        %v486 = vpack.c.bf16 %v473, %v472
        %v487 = vpack.c.bf16 %v475, %v474
        %v488 = vpack.c.bf16 %v477, %v476
        %v489 = vpack.c.bf16 %v479, %v478
        %v490 = vpack.c.bf16 %v481, %v480
        %v491 = vpack.c.bf16 %v483, %v482
        %v492 = vld [vmem:[#allocation7] sm:$0xff]
        %v493 = vld [vmem:[#allocation7 + $0x8] sm:$0xf]
        %v494 = vld [vmem:[#allocation7 + $0xc] sm:$0xff]
        %v495 = vld [vmem:[#allocation7 + $0x14] sm:$0xf]
        %v496 = vld [vmem:[#allocation7 + $0x18] sm:$0xff]
        %v497 = vld [vmem:[#allocation7 + $0x20] sm:$0xf]
        %v498 = vld [vmem:[#allocation7 + $0x24] sm:$0xff]
        %v499 = vld [vmem:[#allocation7 + $0x2c] sm:$0xf]
        %v500 = vld [vmem:[#allocation7 + $0x30] sm:$0xff]
        %v501 = vld [vmem:[#allocation7 + $0x38] sm:$0xf]
        %v502 = vld [vmem:[#allocation7 + $0x3c] sm:$0xff]
        %v503 = vld [vmem:[#allocation7 + $0x44] sm:$0xf]
        %v504 = vld [vmem:[#allocation7 + $0x48] sm:$0xff]
        %v505 = vld [vmem:[#allocation7 + $0x50] sm:$0xf]
        %v506 = vld [vmem:[#allocation7 + $0x54] sm:$0xff]
        %v507 = vld [vmem:[#allocation7 + $0x5c] sm:$0xf]
        %v508 = vld [vmem:[#allocation7 + $0x60] sm:$0xff]
        %v509 = vld [vmem:[#allocation7 + $0x68] sm:$0xf]
        %v510 = vld [vmem:[#allocation7 + $0x6c] sm:$0xff]
        %v511 = vld [vmem:[#allocation7 + $0x74] sm:$0xf]
        %v512 = vld [vmem:[#allocation7 + $0x78] sm:$0xff]
        %v513 = vld [vmem:[#allocation7 + $0x80] sm:$0xf]
        %v514 = vld [vmem:[#allocation7 + $0x84] sm:$0xff]
        %v515 = vld [vmem:[#allocation7 + $0x8c] sm:$0xf]
        %v516 = vld [vmem:[#allocation7 + $0x90] sm:$0xff]
        %v517 = vld [vmem:[#allocation7 + $0x98] sm:$0xf]
        %v518 = vld [vmem:[#allocation7 + $0x9c] sm:$0xff]
        %v519 = vld [vmem:[#allocation7 + $0xa4] sm:$0xf]
        %v520 = vld [vmem:[#allocation7 + $0xa8] sm:$0xff]
        %v521 = vld [vmem:[#allocation7 + $0xb0] sm:$0xf]
        %v522 = vld [vmem:[#allocation7 + $0xb4] sm:$0xff]
        %v523 = vld [vmem:[#allocation7 + $0xbc] sm:$0xf]
        %v556 = vunpack.c.l.b16 %v492
        %v557 = vunpack.c.h.b16 %v492
        %v558 = vunpack.c.l.b16 %v493
        %v559 = vunpack.c.l.b16 %v494
        %v560 = vunpack.c.h.b16 %v494
        %v561 = vunpack.c.l.b16 %v495
        %v562 = vunpack.c.l.b16 %v496
        %v563 = vunpack.c.h.b16 %v496
        %v564 = vunpack.c.l.b16 %v497
        %v565 = vunpack.c.l.b16 %v498
        %v566 = vunpack.c.h.b16 %v498
        %v567 = vunpack.c.l.b16 %v499
        %v568 = vunpack.c.l.b16 %v500
        %v569 = vunpack.c.h.b16 %v500
        %v570 = vunpack.c.l.b16 %v501
        %v571 = vunpack.c.l.b16 %v502
        %v572 = vunpack.c.h.b16 %v502
        %v573 = vunpack.c.l.b16 %v503
        %v574 = vunpack.c.l.b16 %v504
        %v575 = vunpack.c.h.b16 %v504
        %v576 = vunpack.c.l.b16 %v505
        %v577 = vunpack.c.l.b16 %v506
        %v578 = vunpack.c.h.b16 %v506
        %v579 = vunpack.c.l.b16 %v507
        %v580 = vunpack.c.l.b16 %v508
        %v581 = vunpack.c.h.b16 %v508
        %v582 = vunpack.c.l.b16 %v509
        %v583 = vunpack.c.l.b16 %v510
        %v584 = vunpack.c.h.b16 %v510
        %v585 = vunpack.c.l.b16 %v511
        %v586 = vunpack.c.l.b16 %v512
        %v587 = vunpack.c.h.b16 %v512
        %v588 = vunpack.c.l.b16 %v513
        %v589 = vunpack.c.l.b16 %v514
        %v590 = vunpack.c.h.b16 %v514
        %v591 = vunpack.c.l.b16 %v515
        %v592 = vunpack.c.l.b16 %v516
        %v593 = vunpack.c.h.b16 %v516
        %v594 = vunpack.c.l.b16 %v517
        %v595 = vunpack.c.l.b16 %v518
        %v596 = vunpack.c.h.b16 %v518
        %v597 = vunpack.c.l.b16 %v519
        %v598 = vunpack.c.l.b16 %v520
        %v599 = vunpack.c.h.b16 %v520
        %v600 = vunpack.c.l.b16 %v521
        %v601 = vunpack.c.l.b16 %v522
        %v602 = vunpack.c.h.b16 %v522
        %v603 = vunpack.c.l.b16 %v523
        %v604 = vpack.c.b16 %v559, %v556
        %v605 = vpack.c.b16 %v560, %v557
        %v606 = vpack.c.b16 %v561, %v558
        %v607 = vpack.c.b16 %v565, %v562
        %v608 = vpack.c.b16 %v566, %v563
        %v609 = vpack.c.b16 %v567, %v564
        %v610 = vpack.c.b16 %v571, %v568
        %v611 = vpack.c.b16 %v572, %v569
        %v612 = vpack.c.b16 %v573, %v570
        %v613 = vpack.c.b16 %v577, %v574
        %v614 = vpack.c.b16 %v578, %v575
        %v615 = vpack.c.b16 %v579, %v576
        %v616 = vpack.c.b16 %v583, %v580
        %v617 = vpack.c.b16 %v584, %v581
        %v618 = vpack.c.b16 %v585, %v582
        %v619 = vpack.c.b16 %v589, %v586
        %v620 = vpack.c.b16 %v590, %v587
        %v621 = vpack.c.b16 %v591, %v588
        %v622 = vpack.c.b16 %v595, %v592
        %v623 = vpack.c.b16 %v596, %v593
        %v624 = vpack.c.b16 %v597, %v594
        %v625 = vpack.c.b16 %v601, %v598
        %v626 = vpack.c.b16 %v602, %v599
        %v627 = vpack.c.b16 %v603, %v600
        %652 = vmatpush.bf16.msra.mxu0 %v625
        %653 = vmatpush.bf16.msra.mxu0 %v622
        %654 = vmatpush.bf16.msra.mxu0 %v619
        %655 = vmatpush.bf16.msra.mxu0 %v616
        %656 = vmatpush.bf16.msra.mxu0 %v613
        %657 = vmatpush.bf16.msra.mxu0 %v610
        %658 = vmatpush.bf16.msra.mxu0 %v607
        %659 = vmatpush.bf16.msra.mxu0 %v604
        %660 = vmatmul.bf16.gmra.mxu0 %v484
        %v661 = vpop.f32.mrf.mxu0
        %v662 = vadd.f32 0.0, %v661
        %v663 = vpop.f32.mrf.mxu0
        %v664 = vadd.f32 0.0, %v663
        %665 = vmatmul.bf16.gmra.mxu0 %v485
        %v666 = vpop.f32.mrf.mxu0
        %v667 = vadd.f32 0.0, %v666
        %v668 = vpop.f32.mrf.mxu0
        %v669 = vadd.f32 0.0, %v668
        %670 = vmatmul.bf16.gmra.mxu0 %v486
        %v671 = vpop.f32.mrf.mxu0
        %v672 = vadd.f32 0.0, %v671
        %v673 = vpop.f32.mrf.mxu0
        %v674 = vadd.f32 0.0, %v673
        %675 = vmatmul.bf16.gmra.mxu0 %v487
        %v676 = vpop.f32.mrf.mxu0
        %v677 = vadd.f32 0.0, %v676
        %v678 = vpop.f32.mrf.mxu0
        %v679 = vadd.f32 0.0, %v678
        %680 = vmatmul.bf16.gmra.mxu0 %v488
        %v681 = vpop.f32.mrf.mxu0
        %v682 = vadd.f32 0.0, %v681
        %v683 = vpop.f32.mrf.mxu0
        %v684 = vadd.f32 0.0, %v683
        %685 = vmatmul.bf16.gmra.mxu0 %v489
        %v686 = vpop.f32.mrf.mxu0
        %v687 = vadd.f32 0.0, %v686
        %v688 = vpop.f32.mrf.mxu0
        %v689 = vadd.f32 0.0, %v688
        %690 = vmatmul.bf16.gmra.mxu0 %v490
        %v691 = vpop.f32.mrf.mxu0
        %v692 = vadd.f32 0.0, %v691
        %v693 = vpop.f32.mrf.mxu0
        %v694 = vadd.f32 0.0, %v693
        %695 = vmatmul.bf16.gmra.mxu0 %v491
        %v696 = vpop.f32.mrf.mxu0
        %v697 = vadd.f32 0.0, %v696
        %v698 = vpop.f32.mrf.mxu0
        %v699 = vadd.f32 0.0, %v698
        %700 = vdwg.mxu0
        %701 = vmatpush.bf16.msra.mxu0 %v626
        %702 = vmatpush.bf16.msra.mxu0 %v623
        %703 = vmatpush.bf16.msra.mxu0 %v620
        %704 = vmatpush.bf16.msra.mxu0 %v617
        %705 = vmatpush.bf16.msra.mxu0 %v614
        %706 = vmatpush.bf16.msra.mxu0 %v611
        %707 = vmatpush.bf16.msra.mxu0 %v608
        %708 = vmatpush.bf16.msra.mxu0 %v605
        %709 = vmatmul.bf16.gmra.mxu0 %v484
        %v710 = vpop.f32.mrf.mxu0
        %v711 = vadd.f32 0.0, %v710
        %v712 = vpop.f32.mrf.mxu0
        %v713 = vadd.f32 0.0, %v712
        %714 = vmatmul.bf16.gmra.mxu0 %v485
        %v715 = vpop.f32.mrf.mxu0
        %v716 = vadd.f32 0.0, %v715
        %v717 = vpop.f32.mrf.mxu0
        %v718 = vadd.f32 0.0, %v717
        %719 = vmatmul.bf16.gmra.mxu0 %v486
        %v720 = vpop.f32.mrf.mxu0
        %v721 = vadd.f32 0.0, %v720
        %v722 = vpop.f32.mrf.mxu0
        %v723 = vadd.f32 0.0, %v722
        %724 = vmatmul.bf16.gmra.mxu0 %v487
        %v725 = vpop.f32.mrf.mxu0
        %v726 = vadd.f32 0.0, %v725
        %v727 = vpop.f32.mrf.mxu0
        %v728 = vadd.f32 0.0, %v727
        %729 = vmatmul.bf16.gmra.mxu0 %v488
        %v730 = vpop.f32.mrf.mxu0
        %v731 = vadd.f32 0.0, %v730
        %v732 = vpop.f32.mrf.mxu0
        %v733 = vadd.f32 0.0, %v732
        %734 = vmatmul.bf16.gmra.mxu0 %v489
        %v735 = vpop.f32.mrf.mxu0
        %v736 = vadd.f32 0.0, %v735
        %v737 = vpop.f32.mrf.mxu0
        %v738 = vadd.f32 0.0, %v737
        %739 = vmatmul.bf16.gmra.mxu0 %v490
        %v740 = vpop.f32.mrf.mxu0
        %v741 = vadd.f32 0.0, %v740
        %v742 = vpop.f32.mrf.mxu0
        %v743 = vadd.f32 0.0, %v742
        %744 = vmatmul.bf16.gmra.mxu0 %v491
        %v745 = vpop.f32.mrf.mxu0
        %v746 = vadd.f32 0.0, %v745
        %v747 = vpop.f32.mrf.mxu0
        %v748 = vadd.f32 0.0, %v747
        %749 = vdwg.mxu0
        %750 = vmatpush.bf16.msra.mxu0 %v627
        %751 = vmatpush.bf16.msra.mxu0 %v624
        %752 = vmatpush.bf16.msra.mxu0 %v621
        %753 = vmatpush.bf16.msra.mxu0 %v618
        %754 = vmatpush.bf16.msra.mxu0 %v615
        %755 = vmatpush.bf16.msra.mxu0 %v612
        %756 = vmatpush.bf16.msra.mxu0 %v609
        %757 = vmatpush.bf16.msra.mxu0 %v606
        %758 = vmatmul.bf16.gmra.mxu0 %v484
        %v759 = vpop.f32.mrf.mxu0
        %v760 = vadd.f32 0.0, %v759
        %v761 = vpop.f32.mrf.mxu0
        %v762 = vadd.f32 0.0, %v761
        %763 = vmatmul.bf16.gmra.mxu0 %v485
        %v764 = vpop.f32.mrf.mxu0
        %v765 = vadd.f32 0.0, %v764
        %v766 = vpop.f32.mrf.mxu0
        %v767 = vadd.f32 0.0, %v766
        %768 = vmatmul.bf16.gmra.mxu0 %v486
        %v769 = vpop.f32.mrf.mxu0
        %v770 = vadd.f32 0.0, %v769
        %v771 = vpop.f32.mrf.mxu0
        %v772 = vadd.f32 0.0, %v771
        %773 = vmatmul.bf16.gmra.mxu0 %v487
        %v774 = vpop.f32.mrf.mxu0
        %v775 = vadd.f32 0.0, %v774
        %v776 = vpop.f32.mrf.mxu0
        %v777 = vadd.f32 0.0, %v776
        %778 = vmatmul.bf16.gmra.mxu0 %v488
        %v779 = vpop.f32.mrf.mxu0
        %v780 = vadd.f32 0.0, %v779
        %v781 = vpop.f32.mrf.mxu0
        %v782 = vadd.f32 0.0, %v781
        %783 = vmatmul.bf16.gmra.mxu0 %v489
        %v784 = vpop.f32.mrf.mxu0
        %v785 = vadd.f32 0.0, %v784
        %v786 = vpop.f32.mrf.mxu0
        %v787 = vadd.f32 0.0, %v786
        %788 = vmatmul.bf16.gmra.mxu0 %v490
        %v789 = vpop.f32.mrf.mxu0
        %v790 = vadd.f32 0.0, %v789
        %v791 = vpop.f32.mrf.mxu0
        %v792 = vadd.f32 0.0, %v791
        %793 = vmatmul.bf16.gmra.mxu0 %v491
        %v794 = vpop.f32.mrf.mxu0
        %v795 = vadd.f32 0.0, %v794
        %v796 = vpop.f32.mrf.mxu0
        %v797 = vadd.f32 0.0, %v796
        %798 = vdwg.mxu0
        %v799 = vpack.c.bf16 %v662, %v662
        %v800 = vpack.c.bf16 %v664, %v664
        %v801 = vpack.c.bf16 %v667, %v667
        %v802 = vpack.c.bf16 %v669, %v669
        %v803 = vpack.c.bf16 %v672, %v672
        %v804 = vpack.c.bf16 %v674, %v674
        %v805 = vpack.c.bf16 %v677, %v677
        %v806 = vpack.c.bf16 %v679, %v679
        %v807 = vpack.c.bf16 %v682, %v682
        %v808 = vpack.c.bf16 %v684, %v684
        %v809 = vpack.c.bf16 %v687, %v687
        %v810 = vpack.c.bf16 %v689, %v689
        %v811 = vpack.c.bf16 %v692, %v692
        %v812 = vpack.c.bf16 %v694, %v694
        %v813 = vpack.c.bf16 %v697, %v697
        %v814 = vpack.c.bf16 %v699, %v699
        %815 = vst [vmem:[%s308] sm:$0xf] %v799
        %816 = vst [vmem:[%s308 + $0x4] sm:$0xf] %v800
        %817 = vst [vmem:[%s308 + $0x8] sm:$0xf] %v801
        %818 = vst [vmem:[%s308 + $0xc] sm:$0xf] %v802
        %819 = vst [vmem:[%s308 + $0x10] sm:$0xf] %v803
        %820 = vst [vmem:[%s308 + $0x14] sm:$0xf] %v804
        %821 = vst [vmem:[%s308 + $0x18] sm:$0xf] %v805
        %822 = vst [vmem:[%s308 + $0x1c] sm:$0xf] %v806
        %823 = vst [vmem:[%s308 + $0x20] sm:$0xf] %v807
        %824 = vst [vmem:[%s308 + $0x24] sm:$0xf] %v808
        %825 = vst [vmem:[%s308 + $0x28] sm:$0xf] %v809
        %826 = vst [vmem:[%s308 + $0x2c] sm:$0xf] %v810
        %827 = vst [vmem:[%s308 + $0x30] sm:$0xf] %v811
        %828 = vst [vmem:[%s308 + $0x34] sm:$0xf] %v812
        %829 = vst [vmem:[%s308 + $0x38] sm:$0xf] %v813
        %830 = vst [vmem:[%s308 + $0x3c] sm:$0xf] %v814
        %831 = vst [vmem:[%s315] sm:$0xff] %v711
        %832 = vst [vmem:[%s315 + $0x8] sm:$0xff] %v713
        %833 = vst [vmem:[%s315 + $0x10] sm:$0xff] %v716
        %834 = vst [vmem:[%s315 + $0x18] sm:$0xff] %v718
        %835 = vst [vmem:[%s315 + $0x20] sm:$0xff] %v721
        %836 = vst [vmem:[%s315 + $0x28] sm:$0xff] %v723
        %837 = vst [vmem:[%s315 + $0x30] sm:$0xff] %v726
        %838 = vst [vmem:[%s315 + $0x38] sm:$0xff] %v728
        %839 = vst [vmem:[%s315 + $0x40] sm:$0xff] %v731
        %840 = vst [vmem:[%s315 + $0x48] sm:$0xff] %v733
        %841 = vst [vmem:[%s315 + $0x50] sm:$0xff] %v736
        %842 = vst [vmem:[%s315 + $0x58] sm:$0xff] %v738
        %843 = vst [vmem:[%s315 + $0x60] sm:$0xff] %v741
        %844 = vst [vmem:[%s315 + $0x68] sm:$0xff] %v743
        %845 = vst [vmem:[%s315 + $0x70] sm:$0xff] %v746
        %846 = vst [vmem:[%s315 + $0x78] sm:$0xff] %v748
        %847 = vst [vmem:[%s322] sm:$0xff] %v760
        %848 = vst [vmem:[%s322 + $0x8] sm:$0xff] %v762
        %849 = vst [vmem:[%s322 + $0x10] sm:$0xff] %v765
        %850 = vst [vmem:[%s322 + $0x18] sm:$0xff] %v767
        %851 = vst [vmem:[%s322 + $0x20] sm:$0xff] %v770
        %852 = vst [vmem:[%s322 + $0x28] sm:$0xff] %v772
        %853 = vst [vmem:[%s322 + $0x30] sm:$0xff] %v775
        %854 = vst [vmem:[%s322 + $0x38] sm:$0xff] %v777
        %855 = vst [vmem:[%s322 + $0x40] sm:$0xff] %v780
        %856 = vst [vmem:[%s322 + $0x48] sm:$0xff] %v782
        %857 = vst [vmem:[%s322 + $0x50] sm:$0xff] %v785
        %858 = vst [vmem:[%s322 + $0x58] sm:$0xff] %v787
        %859 = vst [vmem:[%s322 + $0x60] sm:$0xff] %v790
        %860 = vst [vmem:[%s322 + $0x68] sm:$0xff] %v792
        %861 = vst [vmem:[%s322 + $0x70] sm:$0xff] %v795
        %862 = vst [vmem:[%s322 + $0x78] sm:$0xff] %v797
        %s863 = sand.u32 %s125, 1
        %s864 = scalar_lea.sflag [#allocation4], %s863
        %s865 = sand.u32 %s125, 1
        %s866 = smul.addr %s865, 64
        %s867 = scalar_lea.vmem [#allocation8], %s866
        %s868 = sand.u32 %s28, 1
        %s869 = scalar_lea.sflag [#allocation10], %s868
        %s870 = sand.u32 %s151, 1
        %s871 = smul.addr %s870, 128
        %s872 = scalar_lea.vmem [#allocation9], %s871
        %s873 = sand.u32 %s28, 1
        %s874 = scalar_lea.sflag [#allocation10], %s873
        %s875 = sand.u32 %s177, 1
        %s876 = smul.addr %s875, 128
        %s877 = scalar_lea.vmem [#allocation11], %s876
        // Predicated region
        $region49: #{tpu_custom_call.1} parent=35 // pred_check
          %p878 = pneg %p135
        $region50: #{tpu_custom_call.1} parent=35 // pred_check_branch
          %880 = sbr.rel (%p878) target = $region52
        $region51: #{tpu_custom_call.1} parent=35 // pred_region
          %s881 = smul.u32 16, %s28
          %883 = vsyncadd %s864, 0
          %s884 = smul.addr %s881, 4
          %s885 = scalar_lea.hbm %s4, %s884
          %s886 = sshll.u32 %s867, 4
          %s887 = int_to_ptr.vmem [resolvable:$true] %s886
          %s888 = sshll.u32 %s885, 4
          %s889 = int_to_ptr.hbm [resolvable:$true] %s888
          %894 = dma.vmem_to_hbm [thread:$0]  %s887, 1024, %s889, %s864, 64, 64, 4
        $region52: #{tpu_custom_call.1} parent=35 // pred_fallthru
          _
        // Predicated region
        $region53: #{tpu_custom_call.1} parent=35 // pred_check
          %p895 = pneg %p161
        $region54: #{tpu_custom_call.1} parent=35 // pred_check_branch
          %897 = sbr.rel (%p895) target = $region56
        $region55: #{tpu_custom_call.1} parent=35 // pred_region
          %s898 = smul.u32 16, %s28
          %900 = vsyncadd %s869, 0
          %s901 = smul.addr %s898, 8
          %s902 = scalar_lea.hbm %s5, %s901
          %s903 = sshll.u32 %s872, 4
          %s904 = int_to_ptr.vmem [resolvable:$true] %s903
          %s905 = sshll.u32 %s902, 4
          %s906 = int_to_ptr.hbm [resolvable:$true] %s905
          %911 = dma.vmem_to_hbm [thread:$0]  %s904, 2048, %s906, %s869, 128, 128, 8
        $region56: #{tpu_custom_call.1} parent=35 // pred_fallthru
          _
        // Predicated region
        $region57: #{tpu_custom_call.1} parent=35 // pred_check
          %p912 = pneg %p187
        $region58: #{tpu_custom_call.1} parent=35 // pred_check_branch
          %914 = sbr.rel (%p912) target = $region60
        $region59: #{tpu_custom_call.1} parent=35 // pred_region
          %s915 = smul.u32 16, %s28
          %917 = vsyncadd %s874, 0
          %s918 = smul.addr %s915, 8
          %s919 = scalar_lea.hbm %s6, %s918
          %s920 = sshll.u32 %s877, 4
          %s921 = int_to_ptr.vmem [resolvable:$true] %s920
          %s922 = sshll.u32 %s919, 4
          %s923 = int_to_ptr.hbm [resolvable:$true] %s922
          %928 = dma.vmem_to_hbm [thread:$0]  %s921, 2048, %s923, %s874, 128, 128, 8
        $region60: #{tpu_custom_call.1} parent=35 // pred_fallthru
          _
      $region36: #{tpu_custom_call.1} parent=5 // pred_fallthru
        _
      %p929 = scmp.le.s32.totalorder 2, %s23
      // Predicated region
      $region61: #{tpu_custom_call.1} parent=5 // pred_check
        %p930 = pneg %p929
      $region62: #{tpu_custom_call.1} parent=5 // pred_check_branch
        %932 = sbr.rel (%p930) target = $region64
      $region63: #{tpu_custom_call.1} parent=5 // pred_region
        %s933 = ssub.s32 %s23, 2
        // Predicated region
        $region65: #{tpu_custom_call.1} parent=63 // pred_check
          %p934 = pneg %p141
        $region66: #{tpu_custom_call.1} parent=63 // pred_check_branch
          %936 = sbr.rel (%p934) target = $region68
        $region67: #{tpu_custom_call.1} parent=63 // pred_region
          %s937 = sand.u32 %s126, 1
          %s938 = scalar_lea.sflag [#allocation4], %s937
          %s939 = sand.u32 %s126, 1
          %s940 = smul.addr %s939, 64
          %s941 = scalar_lea.vmem [#allocation8], %s940
          %943 = dma.done %s938, 1024
        $region68: #{tpu_custom_call.1} parent=63 // pred_fallthru
          _
        // Predicated region
        $region69: #{tpu_custom_call.1} parent=63 // pred_check
          %p944 = pneg %p167
        $region70: #{tpu_custom_call.1} parent=63 // pred_check_branch
          %946 = sbr.rel (%p944) target = $region72
        $region71: #{tpu_custom_call.1} parent=63 // pred_region
          %s947 = sand.u32 %s29, 1
          %s948 = scalar_lea.sflag [#allocation10], %s947
          %s949 = sand.u32 %s152, 1
          %s950 = smul.addr %s949, 128
          %s951 = scalar_lea.vmem [#allocation9], %s950
          %953 = dma.done %s948, 2048
        $region72: #{tpu_custom_call.1} parent=63 // pred_fallthru
          _
        // Predicated region
        $region73: #{tpu_custom_call.1} parent=63 // pred_check
          %p954 = pneg %p193
        $region74: #{tpu_custom_call.1} parent=63 // pred_check_branch
          %956 = sbr.rel (%p954) target = $region76
        $region75: #{tpu_custom_call.1} parent=63 // pred_region
          %s957 = sand.u32 %s29, 1
          %s958 = scalar_lea.sflag [#allocation10], %s957
          %s959 = sand.u32 %s178, 1
          %s960 = smul.addr %s959, 128
          %s961 = scalar_lea.vmem [#allocation11], %s960
          %963 = dma.done %s958, 2048
        $region76: #{tpu_custom_call.1} parent=63 // pred_fallthru
          _
      $region64: #{tpu_custom_call.1} parent=5 // pred_fallthru
        _
    $region6: #{tpu_custom_call.1} parent=1 // loop_footer
      %s27 = sadd.s32 1, %s23
    $region7: #{tpu_custom_call.1} parent=1 // loop_footer_branch
      %22 = sbr.rel target = $region3
    $region8: #{tpu_custom_call.1} parent=1 // loop_exit
      _
    %964 = vsyncpa [#allocation3], 1
    %s965 = scalar_lea.sflag [#allocation3], 1
    %966 = vsyncpa %s965, 1
    %967 = vsyncpa [#allocation6], 1
    %968 = vsyncpa [#allocation4], 1
    %s969 = scalar_lea.sflag [#allocation4], 1
    %970 = vsyncpa %s969, 1
    %971 = vsyncpa [#allocation10], 1
    %s972 = scalar_lea.sflag [#allocation10], 1
    %973 = vsyncpa %s972, 1

</llo_original>
